<compile_context>
chip_gen: v7x
topology: tpu7x:2x2x1
jax: 0.10.0
libtpu: 0.0.40
codegen_flags: <defaults>
</compile_context>

<pallas_src>
import jax
import jax.numpy as jnp
from jax.experimental import pallas as pl
from jax.experimental.pallas import tpu as pltpu


def _round_up(x, m):
    return ((x + m - 1) // m) * m


def _vmem_capacity_bytes():
    """Physical VMEM per TensorCore; conservative fallback if query fails."""
    try:
        info = pltpu.get_tpu_info()
        cap = getattr(info, "vmem_capacity_bytes", None)
        if cap:
            return int(cap)
    except Exception:
        pass
    return 64 * 1024 * 1024  # v7x-sized fallback (safe everywhere)


def _pick_tiles(bc, n, block_budget_bytes):
    """Choose (tile_bc, tile_n): biggest probs block that fits the budget."""
    bc8 = _round_up(bc, 8)
    n128 = _round_up(n, 128)
    bytes_per_full_row = n128 * 4
    # Whole problem fits in one block.
    if bc8 * bytes_per_full_row <= block_budget_bytes:
        return bc8, n128
    # Full rows (no N tiling) with as many rows as the budget allows.
    rows_full_n = (block_budget_bytes // bytes_per_full_row) // 8 * 8
    if rows_full_n >= 8:
        return int(min(bc8, rows_full_n)), n128
    # N too large for even 8 full rows: tile the reduction (N) axis too.
    tile_n = max(128, (block_budget_bytes // (8 * 4)) // 128 * 128)
    return 8, int(min(n128, tile_n))


def _class_loss_kernel(probs_ref, gt_ref, w_ref, out_ref, acc_ref):
    """probs_ref: (TILE_BC, TILE_N) f32, chunk of rows sorted ascending along N.
    gt_ref:      (TILE_BC, 1) f32 ground-truth class vector (0/1).
    w_ref:       (1, TILE_N) f32 pre-normalized foreground weights chunk.
    out_ref:     (TILE_BC, 1) f32 per-row BCE terms (padded rows -> 0).
    acc_ref:     (TILE_BC, 1) f32 VMEM accumulator for the foreground pooling.
    """
    j = pl.program_id(1)

    @pl.when(j == 0)
    def _():
        acc_ref[...] = jnp.zeros_like(acc_ref)

    probs = probs_ref[...]                                    # (TILE_BC, TILE_N)
    w = w_ref[...]                                            # (1, TILE_N)
    # Foreground pooling: VPU multiply + XLU lane reduce, accumulated over N.
    acc_ref[...] += jnp.sum(probs * w, axis=1, keepdims=True)

    @pl.when(j == pl.num_programs(1) - 1)
    def _():
        y = gt_ref[...]                                       # (TILE_BC, 1)
        p_fg = acc_ref[...]
        # Background pooling (q = 0): largest sorted element == last column
        # of the final N chunk (data sorted ascending, N padded at the front).
        p_bg = probs[:, -1:]
        p = jnp.where(y == 0.0, p_bg, p_fg)
        # BCE with PyTorch-style clamping of the log terms at -100.
        log_p = jnp.maximum(jnp.log(p), -100.0)
        log_1mp = jnp.maximum(jnp.log(1.0 - p), -100.0)
        out_ref[...] = -(y * log_p + (1.0 - y) * log_1mp)


def class_loss(segmap_pred, class_vec_gt):
    """segmap_pred: (B, C, H, W) probabilities in [0, 1].
    class_vec_gt:  (B, C) float ground-truth class vector.
    Returns scalar mean BCE loss (matches nn.BCELoss default reduction)."""
    b, c, h, w = segmap_pred.shape
    n = h * w
    bc = b * c

    probs = segmap_pred.reshape(bc, n).astype(jnp.float32)
    # TODO(synk): sort has no Pallas/Mosaic in-kernel lowering; done in JAX.
    probs_sorted = jnp.sort(probs, axis=1)
    class_gt = class_vec_gt.reshape(bc, 1).astype(jnp.float32)

    # Foreground weight row 0.99**(N-1-j), normalized once in the wrapper.
    expnt = jnp.arange(n - 1, -1, -1, dtype=jnp.float32)      # N-1 .. 0
    w_fg = jnp.power(jnp.float32(0.99), expnt)
    w_fg_norm = w_fg / jnp.sum(w_fg)                          # (N,)

    # Generation-aware VMEM budget: v5e/v6e (128 MiB) -> 64 MiB limit,
    # 16 MiB probs block; v7x (64 MiB) -> 32 MiB limit, 8 MiB probs block.
    vmem_cap = _vmem_capacity_bytes()
    vmem_limit = int(min(64 * 1024 * 1024, vmem_cap // 2))
    block_budget = vmem_limit // 4   # double-buffered probs <= half the limit

    tile_bc, tile_n = _pick_tiles(bc, n, block_budget)
    bc_padded = _round_up(bc, tile_bc)
    n_padded = _round_up(n, tile_n)
    pad_bc = bc_padded - bc
    pad_n = n_padded - n

    # Pad N at the *front* with zeros: keeps the rows ascending (probs >= 0)
    # and the true row max in the very last column; padded columns get weight
    # 0 so they don't affect the foreground pooling.  Padded BC rows
    # (probs = 0, y = 0) contribute exactly 0 to the BCE sum.
    if pad_bc or pad_n:
        probs_sorted = jnp.pad(probs_sorted, ((0, pad_bc), (pad_n, 0)))
    if pad_bc:
        class_gt = jnp.pad(class_gt, ((0, pad_bc), (0, 0)))
    w_row = jnp.pad(w_fg_norm, (pad_n, 0)).reshape(1, n_padded)

    grid = (bc_padded // tile_bc, n_padded // tile_n)

    per_row = pl.pallas_call(
        _class_loss_kernel,
        out_shape=jax.ShapeDtypeStruct((bc_padded, 1), jnp.float32),
        grid_spec=pltpu.PrefetchScalarGridSpec(
            num_scalar_prefetch=0,
            grid=grid,
            in_specs=[
                pl.BlockSpec((tile_bc, tile_n), lambda i, j: (i, j)),
                pl.BlockSpec((tile_bc, 1), lambda i, j: (i, 0)),
                pl.BlockSpec((1, tile_n), lambda i, j: (0, j)),
            ],
            out_specs=pl.BlockSpec((tile_bc, 1), lambda i, j: (i, 0)),
            scratch_shapes=[pltpu.VMEM((tile_bc, 1), jnp.float32)],
        ),
        compiler_params=pltpu.CompilerParams(
            dimension_semantics=("parallel", "arbitrary"),
            vmem_limit_bytes=vmem_limit,
        ),
    )(probs_sorted, class_gt, w_row)

    # Tiny final reduction in plain JAX; divide by the *unpadded* row count.
    return jnp.sum(per_row) / float(bc)


def _class_loss_ref(segmap_pred, class_vec_gt):
    """Pure-JAX reference mirroring the PyTorch module."""
    b, c, h, w = segmap_pred.shape
    n = h * w
    probs = segmap_pred.reshape(b, c, n).astype(jnp.float32)
    probs_sorted = jnp.sort(probs, axis=2)
    i = jnp.arange(n - 1, -1, -1, dtype=jnp.float32)           # exponents N-1..0
    q = jnp.where(class_vec_gt[..., None] == 0.0, 0.0, 0.99)   # (B, C, 1)
    weights = jnp.power(q, i[None, None, :])
    weights = jnp.where((q == 0.0) & (i[None, None, :] == 0.0), 1.0, weights)
    z = jnp.sum(weights, axis=2, keepdims=True)
    p = jnp.sum(probs_sorted * weights / z, axis=2)            # (B, C)
    y = class_vec_gt.astype(jnp.float32)
    log_p = jnp.maximum(jnp.log(p), -100.0)
    log_1mp = jnp.maximum(jnp.log(1.0 - p), -100.0)
    return jnp.mean(-(y * log_p + (1.0 - y) * log_1mp))


if __name__ == "__main__":
    B, C, H, W = 2, 4, 16, 16
    key = jax.random.PRNGKey(0)
    k1, k2 = jax.random.split(key)
    # Predicted segmentation map: probabilities in [0, 1).
    segmap_pred = jax.random.uniform(k1, (B, C, H, W), dtype=jnp.float32)
    # Ground-truth class vector: binary {0, 1}.
    class_vec_gt = jax.random.bernoulli(k2, 0.5, (B, C)).astype(jnp.float32)

    loss = class_loss(segmap_pred, class_vec_gt)
    loss = jax.block_until_ready(loss)

    ref = _class_loss_ref(segmap_pred, class_vec_gt)
    assert jnp.allclose(loss, ref, atol=1e-5, rtol=1e-5), (loss, ref)
    print("KERNEL_OK")
</pallas_src>

<mosaic_0001>
module attributes {stable_mosaic.version = 11 : i64} {
  func.func @_class_loss_kernel(%arg0: i32, %arg1: i32, %arg2: memref<8x256xf32, #tpu.memory_space<vmem>>, %arg3: memref<8x1xf32, #tpu.memory_space<vmem>>, %arg4: memref<1x256xf32, #tpu.memory_space<vmem>>, %arg5: memref<8x1xf32, #tpu.memory_space<vmem>>, %arg6: memref<8x1xf32, #tpu.memory_space<vmem>>) attributes {dimension_semantics = [#tpu.dimension_semantics<parallel>, #tpu.dimension_semantics<arbitrary>], iteration_bounds = array<i64: 1, 1>, scalar_prefetch = 0 : i64, scratch_operands = 1 : i64, tpu.core_type = #tpu.core_type<tc>, window_params = [{transform_indices = @transform_0, window_bounds = array<i64: 8, 256>}, {transform_indices = @transform_1, window_bounds = array<i64: 8, 1>}, {transform_indices = @transform_2, window_bounds = array<i64: 1, 256>}, {transform_indices = @transform_3, window_bounds = array<i64: 8, 1>}]} {
    %c0_i32 = arith.constant 0 : i32
    %0 = arith.cmpi eq, %arg1, %c0_i32 : i32
    %1 = arith.extui %0 : i1 to i32
    %c0_i32_0 = arith.constant 0 : i32
    %2 = arith.cmpi ne, %1, %c0_i32_0 : i32
    scf.if %2 {
      %cst_10 = arith.constant 0.000000e+00 : f32
      %15 = vector.broadcast %cst_10 : f32 to vector<8x1xf32>
      %c0_11 = arith.constant 0 : index
      %c0_12 = arith.constant 0 : index
      %16 = vector.load %arg6[%c0_11, %c0_12] : memref<8x1xf32, #tpu.memory_space<vmem>>, vector<8x1xf32>
      tpu.vector_store %arg6[%c0_11, %c0_12], %15 {strides = array<i32>} : memref<8x1xf32, #tpu.memory_space<vmem>>, vector<8x1xf32>,
    } else {
    }
    %c0 = arith.constant 0 : index
    %c0_1 = arith.constant 0 : index
    %3 = vector.load %arg2[%c0, %c0_1] : memref<8x256xf32, #tpu.memory_space<vmem>>, vector<8x256xf32>
    %c0_2 = arith.constant 0 : index
    %c0_3 = arith.constant 0 : index
    %4 = vector.load %arg4[%c0_2, %c0_3] : memref<1x256xf32, #tpu.memory_space<vmem>>, vector<1x256xf32>
    %c0_4 = arith.constant 0 : index
    %c0_5 = arith.constant 0 : index
    %5 = vector.load %arg6[%c0_4, %c0_5] : memref<8x1xf32, #tpu.memory_space<vmem>>, vector<8x1xf32>
    %6 = vector.broadcast %4 : vector<1x256xf32> to vector<8x256xf32>
    %7 = arith.mulf %3, %6 : vector<8x256xf32>
    %cst = arith.constant dense<0.000000e+00> : vector<8xf32>
    %8 = vector.multi_reduction <add>, %7, %cst [1] : vector<8x256xf32> to vector<8xf32>
    %9 = vector.shape_cast %8 : vector<8xf32> to vector<8x1xf32>
    %10 = arith.addf %5, %9 : vector<8x1xf32>
    %c0_6 = arith.constant 0 : index
    %c0_7 = arith.constant 0 : index
    %11 = vector.load %arg6[%c0_6, %c0_7] : memref<8x1xf32, #tpu.memory_space<vmem>>, vector<8x1xf32>
    tpu.vector_store %arg6[%c0_6, %c0_7], %10 {strides = array<i32>} : memref<8x1xf32, #tpu.memory_space<vmem>>, vector<8x1xf32>,
    %c0_i32_8 = arith.constant 0 : i32
    %12 = arith.cmpi eq, %arg1, %c0_i32_8 : i32
    %13 = arith.extui %12 : i1 to i32
    %c0_i32_9 = arith.constant 0 : i32
    %14 = arith.cmpi ne, %13, %c0_i32_9 : i32
    scf.if %14 {
      %c0_10 = arith.constant 0 : index
      %c0_11 = arith.constant 0 : index
      %15 = vector.load %arg3[%c0_10, %c0_11] : memref<8x1xf32, #tpu.memory_space<vmem>>, vector<8x1xf32>
      %c0_12 = arith.constant 0 : index
      %c0_13 = arith.constant 0 : index
      %16 = vector.load %arg6[%c0_12, %c0_13] : memref<8x1xf32, #tpu.memory_space<vmem>>, vector<8x1xf32>
      %17 = vector.extract_strided_slice %3 {offsets = [0, 255], sizes = [8, 1], strides = [1, 1]} : vector<8x256xf32> to vector<8x1xf32>
      %cst_14 = arith.constant 0.000000e+00 : f32
      %18 = vector.broadcast %cst_14 : f32 to vector<8x1xf32>
      %19 = arith.cmpf oeq, %15, %18 : vector<8x1xf32>
      %20 = arith.select %19, %17, %16 : vector<8x1xi1>, vector<8x1xf32>
      %21 = math.log %20 : vector<8x1xf32>
      %cst_15 = arith.constant -1.000000e+02 : f32
      %22 = vector.broadcast %cst_15 : f32 to vector<8x1xf32>
      %23 = arith.maximumf %21, %22 : vector<8x1xf32>
      %cst_16 = arith.constant 1.000000e+00 : f32
      %24 = vector.broadcast %cst_16 : f32 to vector<8x1xf32>
      %25 = arith.subf %24, %20 : vector<8x1xf32>
      %26 = math.log %25 : vector<8x1xf32>
      %cst_17 = arith.constant -1.000000e+02 : f32
      %27 = vector.broadcast %cst_17 : f32 to vector<8x1xf32>
      %28 = arith.maximumf %26, %27 : vector<8x1xf32>
      %29 = arith.mulf %15, %23 : vector<8x1xf32>
      %cst_18 = arith.constant 1.000000e+00 : f32
      %30 = vector.broadcast %cst_18 : f32 to vector<8x1xf32>
      %31 = arith.subf %30, %15 : vector<8x1xf32>
      %32 = arith.mulf %31, %28 : vector<8x1xf32>
      %33 = arith.addf %29, %32 : vector<8x1xf32>
      %cst_19 = arith.constant 0.000000e+00 : f32
      %34 = vector.broadcast %cst_19 : f32 to vector<8x1xf32>
      %35 = arith.subf %34, %33 : vector<8x1xf32>
      %c0_20 = arith.constant 0 : index
      %c0_21 = arith.constant 0 : index
      %36 = vector.load %arg5[%c0_20, %c0_21] : memref<8x1xf32, #tpu.memory_space<vmem>>, vector<8x1xf32>
      tpu.vector_store %arg5[%c0_20, %c0_21], %35 {strides = array<i32>} : memref<8x1xf32, #tpu.memory_space<vmem>>, vector<8x1xf32>,
    } else {
    }
    return
  }
  func.func @transform_0(%arg0: i32, %arg1: i32) -> (i32, i32) {
    %c0_i32 = arith.constant 0 : i32
    return %arg0, %arg1 : i32, i32
  }
  func.func @transform_1(%arg0: i32, %arg1: i32) -> (i32, i32) {
    %c0_i32 = arith.constant 0 : i32
    %c0_i32_0 = arith.constant 0 : i32
    return %arg0, %c0_i32 : i32, i32
  }
  func.func @transform_2(%arg0: i32, %arg1: i32) -> (i32, i32) {
    %c0_i32 = arith.constant 0 : i32
    %c0_i32_0 = arith.constant 0 : i32
    return %c0_i32, %arg1 : i32, i32
  }
  func.func @transform_3(%arg0: i32, %arg1: i32) -> (i32, i32) {
    %c0_i32 = arith.constant 0 : i32
    %c0_i32_0 = arith.constant 0 : i32
    return %arg0, %c0_i32 : i32, i32
  }
}

</mosaic_0001>

<llo_original>
// kernel: tpu_custom_call.1
$region0: #{tpu_custom_call.1}
  #allocation0 [shape = 'u32[]', space=smem, size = 0x4, offset = 0x4, fixed_abs, tag = 'smem constant byte address 0x4 - core index']
  #allocation1 [shape = 'u32[144,128]{1,0:T(1,128)}', space=vmem, size = 0x12000, scoped, tag = 'internal scratch']
  #allocation2 [shape = 'f32[8,1]{1,0:T(8,128)}', space=vmem, size = 0x1000, scoped, tag = 'scratch operand']
  %s0 = inlined_call_operand.hbm [shape: f32[8,256], index: 0, kind: input, shape index: {}]
  %s1 = inlined_call_operand.vmem [shape: f32[8,1], index: 1, kind: input, shape index: {}]
  %s2 = inlined_call_operand.vmem [shape: f32[1,256], index: 2, kind: input, shape index: {}]
  %s3 = inlined_call_operand.vmem [shape: f32[8,1], index: 3, kind: output, shape index: {}]
  %s4 = sld [smem:[#allocation0]]
  $region34: #{tpu_custom_call.1} parent=0
    _
  %s6 = ssub.s32 1, %s4
  %s7 = scalar_select 0, %s6, %s4
  $region1: #{tpu_custom_call.1} parent=0
    #allocation3 [shape = 'u8[8192]{0}', space=vmem, size = 0x2000, scoped, tag = 'input window, operand 0, single buffered']
    #allocation4 [shape = 's32[1]{0}', space=sflag, size = 0x4, scoped, tag = 'scoped memory for tpu_custom_call.1']
    %8 = vsyncpa [#allocation4], 0
    // Predicated region
    $region2: #{tpu_custom_call.1} parent=1 // pred_check
      _
    $region3: #{tpu_custom_call.1} parent=1 // pred_check_branch
      %10 = sbr.rel (0) target = $region5
    $region4: #{tpu_custom_call.1} parent=1 // pred_region
      %s12 = ssub.s32 256, 256
      %13 = vsyncadd [#allocation4], %s12
      %s15 = sshll.u32 [#allocation3], 4
      %s16 = int_to_ptr.vmem [resolvable:$true] %s15
      %18 = dma.hbm_to_vmem [thread:$0]  %s0, 256, %s16, [#allocation4]
    $region5: #{tpu_custom_call.1} parent=1 // pred_fallthru
      _
    // Predicated region
    $region6: #{tpu_custom_call.1} parent=1 // pred_check
      _
    $region7: #{tpu_custom_call.1} parent=1 // pred_check_branch
      %20 = sbr.rel (0) target = $region9
    $region8: #{tpu_custom_call.1} parent=1 // pred_region
      _
    $region9: #{tpu_custom_call.1} parent=1 // pred_fallthru
      _
    // Predicated region
    $region10: #{tpu_custom_call.1} parent=1 // pred_check
      _
    $region11: #{tpu_custom_call.1} parent=1 // pred_check_branch
      %22 = sbr.rel (0) target = $region13
    $region12: #{tpu_custom_call.1} parent=1 // pred_region
      _
    $region13: #{tpu_custom_call.1} parent=1 // pred_fallthru
      _
    // Predicated region
    $region14: #{tpu_custom_call.1} parent=1 // pred_check
      _
    $region15: #{tpu_custom_call.1} parent=1 // pred_check_branch
      %24 = sbr.rel (0) target = $region17
    $region16: #{tpu_custom_call.1} parent=1 // pred_region
      %25 = dma.done [#allocation4], 256
    $region17: #{tpu_custom_call.1} parent=1 // pred_fallthru
      _
    %p26 = scmp.eq.s32.totalorder 0, 0
    // Predicated region
    $region18: #{tpu_custom_call.1} parent=1 // pred_check
      %p27 = pneg %p26
    $region19: #{tpu_custom_call.1} parent=1 // pred_check_branch
      %29 = sbr.rel (%p27) target = $region21
    $region20: #{tpu_custom_call.1} parent=1 // pred_region
      %vm30 = vcmask 7168
      %31 = vst.msk [vmem:[#allocation2] sm:$0xff] %vm30, 0.0
    $region21: #{tpu_custom_call.1} parent=1 // pred_fallthru
      _
    %v32 = vld [vmem:[#allocation3] sm:$0xff]
    %v33 = vld [vmem:[#allocation3 + $0x8] sm:$0xff]
    %v34 = vld [vmem:[%s2] sm:$0x3]
    %v35 = vld [vmem:[#allocation2] sm:$0xff]
    %v37 = vlaneseq
    %v38 = vshrl.u32 %v37, 7
    %v39 = vsub.s32 0, %v38
    %v40 = vrot.slane %v34, %v39
    %v41 = vlaneseq
    %v42 = vshrl.u32 %v41, 7
    %v43 = vsub.s32 1, %v42
    %v44 = vrot.slane %v34, %v43
    %v47 = vmul.f32 %v32, %v40
    %v48 = vmul.f32 %v33, %v44
    %v49 = vadd.f32 %v47, %v48
    %50 = vadd.xlane.f32.xlu0 %v49
    %v51 = vpop.xlane.xlu0 %50
    %v52 = vadd.f32 %v35, %v51
    %vm53 = vcmask 7168
    %54 = vst.msk [vmem:[#allocation2] sm:$0xff] %vm53, %v52
    // Predicated region
    $region22: #{tpu_custom_call.1} parent=1 // pred_check
      %p55 = pneg %p26
    $region23: #{tpu_custom_call.1} parent=1 // pred_check_branch
      %57 = sbr.rel (%p55) target = $region25
    $region24: #{tpu_custom_call.1} parent=1 // pred_region
      %v58 = vld [vmem:[%s1] sm:$0xff]
      %v59 = vld [vmem:[#allocation2] sm:$0xff]
      %vm60 = vcmp.eq.f32.partialorder %v58, 0.0
      %62 = vrot.lane.b32.xlu0 %v33, 1
      %v63 = vpop.permute.xlu0 %62
      %v65 = vsel %vm60, %v63, %v59
      %v66 = vlog2.pop %v65
      %v67 = vmul.f32 %v66, 0.6931472
      %v68 = vmax.f32 %v67, -100.0
      %v69 = vsub.f32 1.0, %v65
      %v70 = vlog2.pop %v69
      %v71 = vmul.f32 %v70, 0.6931472
      %v72 = vmax.f32 %v71, -100.0
      %v73 = vmul.f32 %v58, %v68
      %v74 = vsub.f32 1.0, %v58
      %v75 = vmul.f32 %v74, %v72
      %v76 = vadd.f32 %v73, %v75
      %v77 = vsub.f32 0.0, %v76
      %78 = vst.msk [vmem:[%s3] sm:$0xff] %vm53, %v77
    $region25: #{tpu_custom_call.1} parent=1 // pred_fallthru
      _
    // Predicated region
    $region26: #{tpu_custom_call.1} parent=1 // pred_check
      _
    $region27: #{tpu_custom_call.1} parent=1 // pred_check_branch
      %80 = sbr.rel (0) target = $region29
    $region28: #{tpu_custom_call.1} parent=1 // pred_region
      _
    $region29: #{tpu_custom_call.1} parent=1 // pred_fallthru
      _
    // Predicated region
    $region30: #{tpu_custom_call.1} parent=1 // pred_check
      _
    $region31: #{tpu_custom_call.1} parent=1 // pred_check_branch
      %82 = sbr.rel (0) target = $region33
    $region32: #{tpu_custom_call.1} parent=1 // pred_region
      _
    $region33: #{tpu_custom_call.1} parent=1 // pred_fallthru
      _
    %83 = vsyncpa [#allocation4], 1

</llo_original>
